<compile_context>
chip_gen: v7x
topology: tpu7x:2x2x1
jax: 0.10.0
libtpu: 0.0.40
codegen_flags: <defaults>
</compile_context>

<pallas_src>
import functools

import jax
import jax.numpy as jnp
from jax import lax
from jax.experimental import pallas as pl
from jax.experimental.pallas import tpu as pltpu

EPS = 1e-5
LEAKY_SLOPE = 0.01


# ----------------------------------------------------------------------------
# helpers
# ----------------------------------------------------------------------------
def _round_up(n, m):
    return ((n + m - 1) // m) * m


def _pad2(a, shape):
    """Zero-pad a 2-D array up to `shape`."""
    return jnp.pad(a, [(0, t - s) for s, t in zip(a.shape, shape)])


def _leaky_relu(x):
    return jnp.where(x > 0, x, LEAKY_SLOPE * x)


def _vmem_capacity_bytes():
    """Physical VMEM per TensorCore (generation-aware); conservative fallback."""
    try:
        info = pltpu.get_tpu_info()
        cap = int(getattr(info, "vmem_capacity_bytes", 0))
        if cap > 0:
            return cap
    except Exception:
        pass
    return 64 << 20   # v7x worst case


# ----------------------------------------------------------------------------
# fused single-call kernel (activations resident in VMEM)
# ----------------------------------------------------------------------------
def _fused_kernel(x_ref, w1_ref, g1_ref, be1_ref, w2_ref, g2_ref, be2_ref,
                  w3_ref, b3_ref, o_ref, *, inv_b, b_real, b_pad, mxu_dtype):
    f32 = jnp.float32

    # ---- stage 1: h1 = x @ w1 ; BN1 stats (padded rows are zero -> exact) ----
    h1 = jnp.dot(x_ref[...], w1_ref[...], preferred_element_type=f32)
    m1 = jnp.sum(h1, axis=0, keepdims=True) * inv_b
    v1 = jnp.maximum(jnp.sum(h1 * h1, axis=0, keepdims=True) * inv_b - m1 * m1,
                     0.0)
    sc1 = g1_ref[...] * lax.rsqrt(v1 + EPS)
    sh1 = be1_ref[...] - m1 * sc1
    h1n = _leaky_relu(h1 * sc1 + sh1)
    if b_pad != b_real:   # zero padded rows so they don't pollute BN2 stats
        rows = lax.broadcasted_iota(jnp.int32, h1n.shape, 0)
        h1n = jnp.where(rows < b_real, h1n, 0.0)

    # ---- stage 2: h2 = BN1(h1) @ w2 ; BN2 stats --------------------------------
    h2 = jnp.dot(h1n.astype(mxu_dtype), w2_ref[...], preferred_element_type=f32)
    m2 = jnp.sum(h2, axis=0, keepdims=True) * inv_b
    v2 = jnp.maximum(jnp.sum(h2 * h2, axis=0, keepdims=True) * inv_b - m2 * m2,
                     0.0)
    sc2 = g2_ref[...] * lax.rsqrt(v2 + EPS)
    sh2 = be2_ref[...] - m2 * sc2
    h2n = _leaky_relu(h2 * sc2 + sh2)

    # ---- stage 3: output head --------------------------------------------------
    out = jnp.dot(h2n.astype(mxu_dtype), w3_ref[...],
                  preferred_element_type=f32) + b3_ref[...]
    o_ref[...] = out.astype(o_ref.dtype)


# ----------------------------------------------------------------------------
# tiled-path kernels (per-tile partial BN stats; all grid axes "parallel")
# ----------------------------------------------------------------------------
def _stage1_kernel(x_ref, w_ref, h_ref, psum_ref, psq_ref):
    h = jnp.dot(x_ref[...], w_ref[...], preferred_element_type=jnp.float32)
    psum_ref[0] = jnp.sum(h, axis=0, keepdims=True)
    psq_ref[0] = jnp.sum(h * h, axis=0, keepdims=True)
    h_ref[...] = h.astype(h_ref.dtype)


def _stage2_kernel(h_ref, sc_ref, sh_ref, w_ref, o_ref, psum_ref, psq_ref,
                   *, tb, b_real, needs_mask, mxu_dtype):
    f32 = jnp.float32
    hn = _leaky_relu(h_ref[...].astype(f32) * sc_ref[...] + sh_ref[...])
    if needs_mask:
        base = pl.program_id(0) * tb
        rows = base + lax.broadcasted_iota(jnp.int32, hn.shape, 0)
        hn = jnp.where(rows < b_real, hn, 0.0)   # keep BN2 stats exact
    h2 = jnp.dot(hn.astype(mxu_dtype), w_ref[...], preferred_element_type=f32)
    psum_ref[0] = jnp.sum(h2, axis=0, keepdims=True)
    psq_ref[0] = jnp.sum(h2 * h2, axis=0, keepdims=True)
    o_ref[...] = h2.astype(o_ref.dtype)


def _stage3_kernel(h_ref, sc_ref, sh_ref, w_ref, b_ref, o_ref, *, mxu_dtype):
    f32 = jnp.float32
    hn = _leaky_relu(h_ref[...].astype(f32) * sc_ref[...] + sh_ref[...])
    out = jnp.dot(hn.astype(mxu_dtype), w_ref[...],
                  preferred_element_type=f32) + b_ref[...]
    o_ref[...] = out.astype(o_ref.dtype)


# ----------------------------------------------------------------------------
# wrapper
# ----------------------------------------------------------------------------
def property_predictor(x, params, *, batch_tile=None, use_bf16_matmul=False,
                       force_tiled=False, unpad=True):
    """Forward pass.  x: (B, latent).  Returns (B, property_dimension) float32."""
    (w1, b1, g1, be1, w2, b2, g2, be2, w3, b3) = params
    # b1 / b2 cancel exactly under training-mode BatchNorm (mean removes them).
    del b1, b2

    B, d_in = x.shape
    d1, d2, P = w1.shape[1], w2.shape[1], w3.shape[1]

    # Lane-dense padded feature widths (multiples of 128).
    d_in_p = _round_up(d_in, 128)
    d1_p = _round_up(d1, 128)
    d2_p = _round_up(d2, 128)
    p_p = _round_up(P, 128)

    f32 = jnp.float32
    mxu_dtype = jnp.bfloat16 if use_bf16_matmul else f32
    act_dtype = jnp.bfloat16 if use_bf16_matmul else f32     # streamed h1/h2
    act_bytes = 2 if use_bf16_matmul else 4
    w_bytes = 2 if use_bf16_matmul else 4

    w1_p = _pad2(w1.astype(mxu_dtype), (d_in_p, d1_p))
    w2_p = _pad2(w2.astype(mxu_dtype), (d1_p, d2_p))
    w3_p = _pad2(w3.astype(mxu_dtype), (d2_p, p_p))
    g1_p = _pad2(g1.astype(f32), (1, d1_p))
    be1_p = _pad2(be1.astype(f32), (1, d1_p))
    g2_p = _pad2(g2.astype(f32), (1, d2_p))
    be2_p = _pad2(be2.astype(f32), (1, d2_p))
    b3_p = _pad2(b3.astype(f32), (1, p_p))

    inv_b = 1.0 / float(B)
    vmem_cap = _vmem_capacity_bytes()

    # ---------------- fused single-call path ----------------------------------
    b_pad_f = _round_up(B, 8)
    weight_bytes = (d_in_p * d1_p + d1_p * d2_p + d2_p * p_p) * w_bytes
    fused_bytes = (b_pad_f * d_in_p * act_bytes            # x
                   + 2 * b_pad_f * d1_p * 4                # h1, h1n
                   + 2 * b_pad_f * d2_p * 4                # h2, h2n
                   + b_pad_f * p_p * 4                     # out
                   + weight_bytes)
    fused_budget = int(vmem_cap * 0.40)

    if not force_tiled and fused_bytes <= fused_budget:
        x_p = _pad2(x.astype(mxu_dtype), (b_pad_f, d_in_p))
        kern = functools.partial(_fused_kernel, inv_b=inv_b, b_real=B,
                                 b_pad=b_pad_f, mxu_dtype=mxu_dtype)
        out_p = pl.pallas_call(
            kern,
            out_shape=jax.ShapeDtypeStruct((b_pad_f, p_p), f32),
            compiler_params=pltpu.CompilerParams(
                vmem_limit_bytes=min(vmem_cap,
                                     max(fused_budget + (8 << 20), 32 << 20))),
        )(x_p, w1_p, g1_p, be1_p, w2_p, g2_p, be2_p, w3_p, b3_p)
        return out_p[:B, :P] if unpad else out_p

    # ---------------- tiled 3-call path (large batches) ------------------------
    if batch_tile is None:
        tb = min(512, _round_up(B, 128))        # >=128, prefer 256-512
    else:
        tb = max(8, int(batch_tile))
        tb = _round_up(tb, 16 if use_bf16_matmul else 8)
    b_pad = _round_up(B, tb)                    # pad batch instead of giant tile
    nt = b_pad // tb
    needs_mask = (b_pad != B)

    x_p = _pad2(x.astype(mxu_dtype), (b_pad, d_in_p))

    cparams = pltpu.CompilerParams(
        dimension_semantics=("parallel",),      # megacore-shardable on v7x
        vmem_limit_bytes=min(vmem_cap, 48 << 20))

    # -------- stage 1: h1 = x @ w1 ; per-tile BN1 partial stats ---------------
    h1, ps1, pq1 = pl.pallas_call(
        _stage1_kernel,
        out_shape=(jax.ShapeDtypeStruct((b_pad, d1_p), act_dtype),
                   jax.ShapeDtypeStruct((nt, 1, d1_p), f32),
                   jax.ShapeDtypeStruct((nt, 1, d1_p), f32)),
        grid=(nt,),
        in_specs=[pl.BlockSpec((tb, d_in_p), lambda i: (i, 0)),
                  pl.BlockSpec((d_in_p, d1_p), lambda i: (0, 0))],
        out_specs=(pl.BlockSpec((tb, d1_p), lambda i: (i, 0)),
                   pl.BlockSpec((1, 1, d1_p), lambda i: (i, 0, 0)),
                   pl.BlockSpec((1, 1, d1_p), lambda i: (i, 0, 0))),
        compiler_params=cparams,
    )(x_p, w1_p)

    # Tiny (nt, d) reductions + BN-affine fold in the wrapper.
    m1 = jnp.sum(ps1, axis=0) * inv_b
    v1 = jnp.maximum(jnp.sum(pq1, axis=0) * inv_b - m1 * m1, 0.0)
    sc1 = g1_p * lax.rsqrt(v1 + EPS)
    sh1 = be1_p - m1 * sc1

    # -------- stage 2: BN1 + LeakyReLU + h1n @ w2 ; BN2 partial stats ----------
    kern2 = functools.partial(_stage2_kernel, tb=tb, b_real=B,
                              needs_mask=needs_mask, mxu_dtype=mxu_dtype)
    h2, ps2, pq2 = pl.pallas_call(
        kern2,
        out_shape=(jax.ShapeDtypeStruct((b_pad, d2_p), act_dtype),
                   jax.ShapeDtypeStruct((nt, 1, d2_p), f32),
                   jax.ShapeDtypeStruct((nt, 1, d2_p), f32)),
        grid=(nt,),
        in_specs=[pl.BlockSpec((tb, d1_p), lambda i: (i, 0)),
                  pl.BlockSpec((1, d1_p), lambda i: (0, 0)),
                  pl.BlockSpec((1, d1_p), lambda i: (0, 0)),
                  pl.BlockSpec((d1_p, d2_p), lambda i: (0, 0))],
        out_specs=(pl.BlockSpec((tb, d2_p), lambda i: (i, 0)),
                   pl.BlockSpec((1, 1, d2_p), lambda i: (i, 0, 0)),
                   pl.BlockSpec((1, 1, d2_p), lambda i: (i, 0, 0))),
        compiler_params=cparams,
    )(h1, sc1, sh1, w2_p)

    m2 = jnp.sum(ps2, axis=0) * inv_b
    v2 = jnp.maximum(jnp.sum(pq2, axis=0) * inv_b - m2 * m2, 0.0)
    sc2 = g2_p * lax.rsqrt(v2 + EPS)
    sh2 = be2_p - m2 * sc2

    # -------- stage 3: BN2 + LeakyReLU + output head ---------------------------
    kern3 = functools.partial(_stage3_kernel, mxu_dtype=mxu_dtype)
    out_p = pl.pallas_call(
        kern3,
        out_shape=jax.ShapeDtypeStruct((b_pad, p_p), f32),
        grid=(nt,),
        in_specs=[pl.BlockSpec((tb, d2_p), lambda i: (i, 0)),
                  pl.BlockSpec((1, d2_p), lambda i: (0, 0)),
                  pl.BlockSpec((1, d2_p), lambda i: (0, 0)),
                  pl.BlockSpec((d2_p, p_p), lambda i: (0, 0)),
                  pl.BlockSpec((1, p_p), lambda i: (0, 0))],
        out_specs=pl.BlockSpec((tb, p_p), lambda i: (i, 0)),
        compiler_params=cparams,
    )(h2, sc2, sh2, w3_p, b3_p)

    return out_p[:B, :P] if unpad else out_p


# ----------------------------------------------------------------------------
# params + pure-JAX reference (mirrors PyTorch training-mode forward)
# ----------------------------------------------------------------------------
def init_params(key, latent_dimension, layer_1d, layer_2d, property_dimension):
    ks = jax.random.split(key, 10)
    f32 = jnp.float32
    # Linear weights stored as (in, out) == transposed PyTorch layout.
    w1 = jax.random.normal(ks[0], (latent_dimension, layer_1d), f32) * 0.1
    b1 = jax.random.normal(ks[1], (1, layer_1d), f32) * 0.1
    g1 = 1.0 + 0.1 * jax.random.normal(ks[2], (1, layer_1d), f32)   # BN gamma
    be1 = 0.1 * jax.random.normal(ks[3], (1, layer_1d), f32)        # BN beta
    w2 = jax.random.normal(ks[4], (layer_1d, layer_2d), f32) * 0.1
    b2 = jax.random.normal(ks[5], (1, layer_2d), f32) * 0.1
    g2 = 1.0 + 0.1 * jax.random.normal(ks[6], (1, layer_2d), f32)
    be2 = 0.1 * jax.random.normal(ks[7], (1, layer_2d), f32)
    w3 = jax.random.normal(ks[8], (layer_2d, property_dimension), f32) * 0.1
    b3 = jax.random.normal(ks[9], (1, property_dimension), f32) * 0.1
    return (w1, b1, g1, be1, w2, b2, g2, be2, w3, b3)


def reference_forward(x, params):
    (w1, b1, g1, be1, w2, b2, g2, be2, w3, b3) = params

    def bn(h, g, be):
        m = jnp.mean(h, axis=0, keepdims=True)
        v = jnp.mean((h - m) ** 2, axis=0, keepdims=True)   # biased variance
        return (h - m) / jnp.sqrt(v + EPS) * g + be

    h = x @ w1 + b1
    h = _leaky_relu(bn(h, g1, be1))
    h = h @ w2 + b2
    h = _leaky_relu(bn(h, g2, be2))
    return h @ w3 + b3


# TODO(synk): eval-mode BatchNorm (running statistics) is not implemented; the
# kernel matches the module's default training-mode forward (batch statistics).

# ----------------------------------------------------------------------------
if __name__ == "__main__":
    batch = 64
    latent_dimension = 32
    layer_1d = 64
    layer_2d = 32
    property_dimension = 4

    key = jax.random.PRNGKey(0)
    kx, kp = jax.random.split(key)
    x = jax.random.normal(kx, (batch, latent_dimension), jnp.float32)
    params = init_params(kp, latent_dimension, layer_1d, layer_2d,
                         property_dimension)
    ref = reference_forward(x, params)

    # 1) Fused single-call path (default for small/medium batches; exact f32).
    out_fused = jax.block_until_ready(property_predictor(x, params))
    assert out_fused.shape == (batch, property_dimension)
    assert jnp.allclose(out_fused, ref, atol=3e-4, rtol=3e-4), \
        "fused path mismatch vs reference"

    # 2) Tiled multi-call path (large-batch fallback), forced here to exercise
    #    batch padding, per-tile partial BN stats (nt=2) and the row mask.
    x2 = jax.random.normal(kx, (200, latent_dimension), jnp.float32)
    ref2 = reference_forward(x2, params)
    out_tiled = jax.block_until_ready(
        property_predictor(x2, params, force_tiled=True, batch_tile=128))
    assert out_tiled.shape == (200, property_dimension)
    assert jnp.allclose(out_tiled, ref2, atol=3e-4, rtol=3e-4), \
        "tiled path mismatch vs reference"

    # 3) bf16 MXU-operand / bf16-streaming path: check it runs cleanly.
    out_bf16 = jax.block_until_ready(
        property_predictor(x, params, use_bf16_matmul=True))
    assert out_bf16.shape == (batch, property_dimension)
    assert bool(jnp.all(jnp.isfinite(out_bf16)))

    print("KERNEL_OK")
</pallas_src>

<mosaic_0001>
module attributes {stable_mosaic.version = 11 : i64} {
  func.func @_fused_kernel(%arg0: memref<64x128xf32, #tpu.memory_space<vmem>>, %arg1: memref<128x128xf32, #tpu.memory_space<vmem>>, %arg2: memref<1x128xf32, #tpu.memory_space<vmem>>, %arg3: memref<1x128xf32, #tpu.memory_space<vmem>>, %arg4: memref<128x128xf32, #tpu.memory_space<vmem>>, %arg5: memref<1x128xf32, #tpu.memory_space<vmem>>, %arg6: memref<1x128xf32, #tpu.memory_space<vmem>>, %arg7: memref<128x128xf32, #tpu.memory_space<vmem>>, %arg8: memref<1x128xf32, #tpu.memory_space<vmem>>, %arg9: memref<64x128xf32, #tpu.memory_space<vmem>>) attributes {dimension_semantics = [], scalar_prefetch = 0 : i64, scratch_operands = 0 : i64, tpu.core_type = #tpu.core_type<tc>} {
    %c0 = arith.constant 0 : index
    %c0_0 = arith.constant 0 : index
    %0 = vector.load %arg0[%c0, %c0_0] : memref<64x128xf32, #tpu.memory_space<vmem>>, vector<64x128xf32>
    %c0_1 = arith.constant 0 : index
    %c0_2 = arith.constant 0 : index
    %1 = vector.load %arg1[%c0_1, %c0_2] : memref<128x128xf32, #tpu.memory_space<vmem>>, vector<128x128xf32>
    %cst = arith.constant dense<0.000000e+00> : vector<64x128xf32>
    %2 = tpu.matmul %0, %1, %cst {dimension_numbers = #tpu.dot_dimension_numbers<[1], [0], [0], [1], [0, 0, 1, 1], [], []>} : vector<64x128xf32>, vector<128x128xf32>, vector<64x128xf32> -> vector<64x128xf32>
    %cst_3 = arith.constant dense<0.000000e+00> : vector<128xf32>
    %3 = vector.multi_reduction <add>, %2, %cst_3 [0] : vector<64x128xf32> to vector<128xf32>
    %4 = vector.shape_cast %3 : vector<128xf32> to vector<1x128xf32>
    %cst_4 = arith.constant 1.562500e-02 : f32
    %5 = vector.broadcast %cst_4 : f32 to vector<1x128xf32>
    %6 = arith.mulf %4, %5 : vector<1x128xf32>
    %7 = arith.mulf %2, %2 : vector<64x128xf32>
    %cst_5 = arith.constant dense<0.000000e+00> : vector<128xf32>
    %8 = vector.multi_reduction <add>, %7, %cst_5 [0] : vector<64x128xf32> to vector<128xf32>
    %9 = vector.shape_cast %8 : vector<128xf32> to vector<1x128xf32>
    %cst_6 = arith.constant 1.562500e-02 : f32
    %10 = vector.broadcast %cst_6 : f32 to vector<1x128xf32>
    %11 = arith.mulf %9, %10 : vector<1x128xf32>
    %12 = arith.mulf %6, %6 : vector<1x128xf32>
    %13 = arith.subf %11, %12 : vector<1x128xf32>
    %cst_7 = arith.constant 0.000000e+00 : f32
    %14 = vector.broadcast %cst_7 : f32 to vector<1x128xf32>
    %15 = arith.maximumf %13, %14 : vector<1x128xf32>
    %c0_8 = arith.constant 0 : index
    %c0_9 = arith.constant 0 : index
    %16 = vector.load %arg2[%c0_8, %c0_9] : memref<1x128xf32, #tpu.memory_space<vmem>>, vector<1x128xf32>
    %cst_10 = arith.constant 9.99999974E-6 : f32
    %17 = vector.broadcast %cst_10 : f32 to vector<1x128xf32>
    %18 = arith.addf %15, %17 : vector<1x128xf32>
    %19 = math.rsqrt %18 : vector<1x128xf32>
    %20 = arith.mulf %16, %19 : vector<1x128xf32>
    %c0_11 = arith.constant 0 : index
    %c0_12 = arith.constant 0 : index
    %21 = vector.load %arg3[%c0_11, %c0_12] : memref<1x128xf32, #tpu.memory_space<vmem>>, vector<1x128xf32>
    %22 = arith.mulf %6, %20 : vector<1x128xf32>
    %23 = arith.subf %21, %22 : vector<1x128xf32>
    %24 = vector.broadcast %20 : vector<1x128xf32> to vector<64x128xf32>
    %25 = arith.mulf %2, %24 : vector<64x128xf32>
    %26 = vector.broadcast %23 : vector<1x128xf32> to vector<64x128xf32>
    %27 = arith.addf %25, %26 : vector<64x128xf32>
    %cst_13 = arith.constant 0.000000e+00 : f32
    %28 = vector.broadcast %cst_13 : f32 to vector<64x128xf32>
    %29 = arith.cmpf ogt, %27, %28 : vector<64x128xf32>
    %cst_14 = arith.constant 0.00999999977 : f32
    %30 = vector.broadcast %cst_14 : f32 to vector<64x128xf32>
    %31 = arith.mulf %30, %27 : vector<64x128xf32>
    %32 = arith.select %29, %27, %31 : vector<64x128xi1>, vector<64x128xf32>
    %c0_15 = arith.constant 0 : index
    %c0_16 = arith.constant 0 : index
    %33 = vector.load %arg4[%c0_15, %c0_16] : memref<128x128xf32, #tpu.memory_space<vmem>>, vector<128x128xf32>
    %cst_17 = arith.constant dense<0.000000e+00> : vector<64x128xf32>
    %34 = tpu.matmul %32, %33, %cst_17 {dimension_numbers = #tpu.dot_dimension_numbers<[1], [0], [0], [1], [0, 0, 1, 1], [], []>} : vector<64x128xf32>, vector<128x128xf32>, vector<64x128xf32> -> vector<64x128xf32>
    %cst_18 = arith.constant dense<0.000000e+00> : vector<128xf32>
    %35 = vector.multi_reduction <add>, %34, %cst_18 [0] : vector<64x128xf32> to vector<128xf32>
    %36 = vector.shape_cast %35 : vector<128xf32> to vector<1x128xf32>
    %cst_19 = arith.constant 1.562500e-02 : f32
    %37 = vector.broadcast %cst_19 : f32 to vector<1x128xf32>
    %38 = arith.mulf %36, %37 : vector<1x128xf32>
    %39 = arith.mulf %34, %34 : vector<64x128xf32>
    %cst_20 = arith.constant dense<0.000000e+00> : vector<128xf32>
    %40 = vector.multi_reduction <add>, %39, %cst_20 [0] : vector<64x128xf32> to vector<128xf32>
    %41 = vector.shape_cast %40 : vector<128xf32> to vector<1x128xf32>
    %cst_21 = arith.constant 1.562500e-02 : f32
    %42 = vector.broadcast %cst_21 : f32 to vector<1x128xf32>
    %43 = arith.mulf %41, %42 : vector<1x128xf32>
    %44 = arith.mulf %38, %38 : vector<1x128xf32>
    %45 = arith.subf %43, %44 : vector<1x128xf32>
    %cst_22 = arith.constant 0.000000e+00 : f32
    %46 = vector.broadcast %cst_22 : f32 to vector<1x128xf32>
    %47 = arith.maximumf %45, %46 : vector<1x128xf32>
    %c0_23 = arith.constant 0 : index
    %c0_24 = arith.constant 0 : index
    %48 = vector.load %arg5[%c0_23, %c0_24] : memref<1x128xf32, #tpu.memory_space<vmem>>, vector<1x128xf32>
    %cst_25 = arith.constant 9.99999974E-6 : f32
    %49 = vector.broadcast %cst_25 : f32 to vector<1x128xf32>
    %50 = arith.addf %47, %49 : vector<1x128xf32>
    %51 = math.rsqrt %50 : vector<1x128xf32>
    %52 = arith.mulf %48, %51 : vector<1x128xf32>
    %c0_26 = arith.constant 0 : index
    %c0_27 = arith.constant 0 : index
    %53 = vector.load %arg6[%c0_26, %c0_27] : memref<1x128xf32, #tpu.memory_space<vmem>>, vector<1x128xf32>
    %54 = arith.mulf %38, %52 : vector<1x128xf32>
    %55 = arith.subf %53, %54 : vector<1x128xf32>
    %56 = vector.broadcast %52 : vector<1x128xf32> to vector<64x128xf32>
    %57 = arith.mulf %34, %56 : vector<64x128xf32>
    %58 = vector.broadcast %55 : vector<1x128xf32> to vector<64x128xf32>
    %59 = arith.addf %57, %58 : vector<64x128xf32>
    %cst_28 = arith.constant 0.000000e+00 : f32
    %60 = vector.broadcast %cst_28 : f32 to vector<64x128xf32>
    %61 = arith.cmpf ogt, %59, %60 : vector<64x128xf32>
    %cst_29 = arith.constant 0.00999999977 : f32
    %62 = vector.broadcast %cst_29 : f32 to vector<64x128xf32>
    %63 = arith.mulf %62, %59 : vector<64x128xf32>
    %64 = arith.select %61, %59, %63 : vector<64x128xi1>, vector<64x128xf32>
    %c0_30 = arith.constant 0 : index
    %c0_31 = arith.constant 0 : index
    %65 = vector.load %arg7[%c0_30, %c0_31] : memref<128x128xf32, #tpu.memory_space<vmem>>, vector<128x128xf32>
    %cst_32 = arith.constant dense<0.000000e+00> : vector<64x128xf32>
    %66 = tpu.matmul %64, %65, %cst_32 {dimension_numbers = #tpu.dot_dimension_numbers<[1], [0], [0], [1], [0, 0, 1, 1], [], []>} : vector<64x128xf32>, vector<128x128xf32>, vector<64x128xf32> -> vector<64x128xf32>
    %c0_33 = arith.constant 0 : index
    %c0_34 = arith.constant 0 : index
    %67 = vector.load %arg8[%c0_33, %c0_34] : memref<1x128xf32, #tpu.memory_space<vmem>>, vector<1x128xf32>
    %68 = vector.broadcast %67 : vector<1x128xf32> to vector<64x128xf32>
    %69 = arith.addf %66, %68 : vector<64x128xf32>
    %c0_35 = arith.constant 0 : index
    %c0_36 = arith.constant 0 : index
    %70 = vector.load %arg9[%c0_35, %c0_36] : memref<64x128xf32, #tpu.memory_space<vmem>>, vector<64x128xf32>
    tpu.vector_store %arg9[%c0_35, %c0_36], %69 {strides = array<i32>} : memref<64x128xf32, #tpu.memory_space<vmem>>, vector<64x128xf32>,
    return
  }
}

</mosaic_0001>

<llo_original>
// kernel: tpu_custom_call.1
$region0: #{tpu_custom_call.1}
  #allocation0 [shape = 'u32[]', space=smem, size = 0x4, offset = 0x4, fixed_abs, tag = 'smem constant byte address 0x4 - core index']
  #allocation1 [shape = 'u32[144,128]{1,0:T(1,128)}', space=vmem, size = 0x12000, scoped, tag = 'internal scratch']
  %s0 = inlined_call_operand.hbm [shape: f32[64,128], index: 0, kind: input, shape index: {}]
  %s1 = inlined_call_operand.hbm [shape: f32[128,128], index: 1, kind: input, shape index: {}]
  %s2 = inlined_call_operand.vmem [shape: f32[1,128], index: 2, kind: input, shape index: {}]
  %s3 = inlined_call_operand.vmem [shape: f32[1,128], index: 3, kind: input, shape index: {}]
  %s4 = inlined_call_operand.hbm [shape: f32[128,128], index: 4, kind: input, shape index: {}]
  %s5 = inlined_call_operand.vmem [shape: f32[1,128], index: 5, kind: input, shape index: {}]
  %s6 = inlined_call_operand.vmem [shape: f32[1,128], index: 6, kind: input, shape index: {}]
  %s7 = inlined_call_operand.hbm [shape: f32[128,128], index: 7, kind: input, shape index: {}]
  %s8 = inlined_call_operand.vmem [shape: f32[1,128], index: 8, kind: input, shape index: {}]
  %s9 = inlined_call_operand.hbm [shape: f32[64,128], index: 9, kind: output, shape index: {}]
  %s10 = sld [smem:[#allocation0]]
  $region62: #{tpu_custom_call.1} parent=0
    _
  %s12 = ssub.s32 1, %s10
  %s13 = scalar_select 0, %s12, %s10
  $region1: #{tpu_custom_call.1} parent=0
    #allocation2 [shape = 'u8[32768]{0}', space=vmem, size = 0x8000, scoped, tag = 'input window, operand 0, single buffered']
    #allocation3 [shape = 's32[1]{0}', space=sflag, size = 0x4, scoped, tag = 'scoped memory for tpu_custom_call.1']
    #allocation4 [shape = 's32[1]{0}', space=sflag, size = 0x4, scoped, tag = 'scoped memory for tpu_custom_call.1']
    #allocation5 [shape = 'u8[65536]{0}', space=vmem, size = 0x10000, scoped, tag = 'input window, operand 1, single buffered']
    #allocation6 [shape = 's32[1]{0}', space=sflag, size = 0x4, scoped, tag = 'scoped memory for tpu_custom_call.1']
    #allocation7 [shape = 'u8[65536]{0}', space=vmem, size = 0x10000, scoped, tag = 'input window, operand 4, single buffered']
    #allocation8 [shape = 'u8[65536]{0}', space=vmem, size = 0x10000, scoped, tag = 'input window, operand 7, single buffered']
    #allocation9 [shape = 's32[1]{0}', space=sflag, size = 0x4, scoped, tag = 'scoped memory for tpu_custom_call.1']
    #allocation10 [shape = 'u8[32768]{0}', space=vmem, size = 0x8000, scoped, tag = 'output window, operand 0, single buffered']
    %14 = vsyncpa [#allocation3], 0
    %15 = vsyncpa [#allocation6], 0
    %16 = vsyncpa [#allocation9], 0
    %17 = vsyncpa [#allocation4], 0
    // Predicated region
    $region2: #{tpu_custom_call.1} parent=1 // pred_check
      _
    $region3: #{tpu_custom_call.1} parent=1 // pred_check_branch
      %19 = sbr.rel (0) target = $region5
    $region4: #{tpu_custom_call.1} parent=1 // pred_region
      %s21 = ssub.s32 1024, 1024
      %22 = vsyncadd [#allocation3], %s21
      %s23 = sshll.u32 [#allocation2], 4
      %s24 = int_to_ptr.vmem [resolvable:$true] %s23
      %29 = dma.hbm_to_vmem [thread:$0]  %s0, 1024, %s24, [#allocation3], 128, 128, 8
    $region5: #{tpu_custom_call.1} parent=1 // pred_fallthru
      _
    // Predicated region
    $region6: #{tpu_custom_call.1} parent=1 // pred_check
      _
    $region7: #{tpu_custom_call.1} parent=1 // pred_check_branch
      %31 = sbr.rel (0) target = $region9
    $region8: #{tpu_custom_call.1} parent=1 // pred_region
      %s33 = ssub.s32 2048, 2048
      %34 = vsyncadd [#allocation6], %s33
      %s35 = sshll.u32 [#allocation5], 4
      %s36 = int_to_ptr.vmem [resolvable:$true] %s35
      %41 = dma.hbm_to_vmem [thread:$0]  %s1, 2048, %s36, [#allocation6], 128, 128, 8
    $region9: #{tpu_custom_call.1} parent=1 // pred_fallthru
      _
    // Predicated region
    $region10: #{tpu_custom_call.1} parent=1 // pred_check
      _
    $region11: #{tpu_custom_call.1} parent=1 // pred_check_branch
      %43 = sbr.rel (0) target = $region13
    $region12: #{tpu_custom_call.1} parent=1 // pred_region
      _
    $region13: #{tpu_custom_call.1} parent=1 // pred_fallthru
      _
    // Predicated region
    $region14: #{tpu_custom_call.1} parent=1 // pred_check
      _
    $region15: #{tpu_custom_call.1} parent=1 // pred_check_branch
      %45 = sbr.rel (0) target = $region17
    $region16: #{tpu_custom_call.1} parent=1 // pred_region
      _
    $region17: #{tpu_custom_call.1} parent=1 // pred_fallthru
      _
    // Predicated region
    $region18: #{tpu_custom_call.1} parent=1 // pred_check
      _
    $region19: #{tpu_custom_call.1} parent=1 // pred_check_branch
      %47 = sbr.rel (0) target = $region21
    $region20: #{tpu_custom_call.1} parent=1 // pred_region
      %s49 = ssub.s32 2048, 2048
      %50 = vsyncadd [#allocation6], %s49
      %s51 = sshll.u32 [#allocation7], 4
      %s52 = int_to_ptr.vmem [resolvable:$true] %s51
      %57 = dma.hbm_to_vmem [thread:$0]  %s4, 2048, %s52, [#allocation6], 128, 128, 8
    $region21: #{tpu_custom_call.1} parent=1 // pred_fallthru
      _
    // Predicated region
    $region22: #{tpu_custom_call.1} parent=1 // pred_check
      _
    $region23: #{tpu_custom_call.1} parent=1 // pred_check_branch
      %59 = sbr.rel (0) target = $region25
    $region24: #{tpu_custom_call.1} parent=1 // pred_region
      _
    $region25: #{tpu_custom_call.1} parent=1 // pred_fallthru
      _
    // Predicated region
    $region26: #{tpu_custom_call.1} parent=1 // pred_check
      _
    $region27: #{tpu_custom_call.1} parent=1 // pred_check_branch
      %61 = sbr.rel (0) target = $region29
    $region28: #{tpu_custom_call.1} parent=1 // pred_region
      _
    $region29: #{tpu_custom_call.1} parent=1 // pred_fallthru
      _
    // Predicated region
    $region30: #{tpu_custom_call.1} parent=1 // pred_check
      _
    $region31: #{tpu_custom_call.1} parent=1 // pred_check_branch
      %63 = sbr.rel (0) target = $region33
    $region32: #{tpu_custom_call.1} parent=1 // pred_region
      %s65 = ssub.s32 2048, 2048
      %66 = vsyncadd [#allocation9], %s65
      %s67 = sshll.u32 [#allocation8], 4
      %s68 = int_to_ptr.vmem [resolvable:$true] %s67
      %73 = dma.hbm_to_vmem [thread:$0]  %s7, 2048, %s68, [#allocation9], 128, 128, 8
    $region33: #{tpu_custom_call.1} parent=1 // pred_fallthru
      _
    // Predicated region
    $region34: #{tpu_custom_call.1} parent=1 // pred_check
      _
    $region35: #{tpu_custom_call.1} parent=1 // pred_check_branch
      %75 = sbr.rel (0) target = $region37
    $region36: #{tpu_custom_call.1} parent=1 // pred_region
      _
    $region37: #{tpu_custom_call.1} parent=1 // pred_fallthru
      _
    // Predicated region
    $region38: #{tpu_custom_call.1} parent=1 // pred_check
      _
    $region39: #{tpu_custom_call.1} parent=1 // pred_check_branch
      %77 = sbr.rel (0) target = $region41
    $region40: #{tpu_custom_call.1} parent=1 // pred_region
      %78 = dma.done [#allocation3], 1024
    $region41: #{tpu_custom_call.1} parent=1 // pred_fallthru
      _
    // Predicated region
    $region42: #{tpu_custom_call.1} parent=1 // pred_check
      _
    $region43: #{tpu_custom_call.1} parent=1 // pred_check_branch
      %80 = sbr.rel (0) target = $region45
    $region44: #{tpu_custom_call.1} parent=1 // pred_region
      %81 = dma.done [#allocation6], 2048
    $region45: #{tpu_custom_call.1} parent=1 // pred_fallthru
      _
    // Predicated region
    $region46: #{tpu_custom_call.1} parent=1 // pred_check
      _
    $region47: #{tpu_custom_call.1} parent=1 // pred_check_branch
      %83 = sbr.rel (0) target = $region49
    $region48: #{tpu_custom_call.1} parent=1 // pred_region
      %84 = dma.done [#allocation6], 2048
    $region49: #{tpu_custom_call.1} parent=1 // pred_fallthru
      _
    // Predicated region
    $region50: #{tpu_custom_call.1} parent=1 // pred_check
      _
    $region51: #{tpu_custom_call.1} parent=1 // pred_check_branch
      %86 = sbr.rel (0) target = $region53
    $region52: #{tpu_custom_call.1} parent=1 // pred_region
      %87 = dma.done [#allocation9], 2048
    $region53: #{tpu_custom_call.1} parent=1 // pred_fallthru
      _
    %v88 = vld [vmem:[#allocation2] sm:$0xff]
    %v89 = vld [vmem:[#allocation2 + $0x8] sm:$0xff]
    %v90 = vld [vmem:[#allocation2 + $0x10] sm:$0xff]
    %v91 = vld [vmem:[#allocation2 + $0x18] sm:$0xff]
    %v92 = vld [vmem:[#allocation2 + $0x20] sm:$0xff]
    %v93 = vld [vmem:[#allocation2 + $0x28] sm:$0xff]
    %v94 = vld [vmem:[#allocation2 + $0x30] sm:$0xff]
    %v95 = vld [vmem:[#allocation2 + $0x38] sm:$0xff]
    %v96 = vld [vmem:[#allocation5] sm:$0xff]
    %v97 = vld [vmem:[#allocation5 + $0x8] sm:$0xff]
    %v98 = vld [vmem:[#allocation5 + $0x10] sm:$0xff]
    %v99 = vld [vmem:[#allocation5 + $0x18] sm:$0xff]
    %v100 = vld [vmem:[#allocation5 + $0x20] sm:$0xff]
    %v101 = vld [vmem:[#allocation5 + $0x28] sm:$0xff]
    %v102 = vld [vmem:[#allocation5 + $0x30] sm:$0xff]
    %v103 = vld [vmem:[#allocation5 + $0x38] sm:$0xff]
    %v104 = vld [vmem:[#allocation5 + $0x40] sm:$0xff]
    %v105 = vld [vmem:[#allocation5 + $0x48] sm:$0xff]
    %v106 = vld [vmem:[#allocation5 + $0x50] sm:$0xff]
    %v107 = vld [vmem:[#allocation5 + $0x58] sm:$0xff]
    %v108 = vld [vmem:[#allocation5 + $0x60] sm:$0xff]
    %v109 = vld [vmem:[#allocation5 + $0x68] sm:$0xff]
    %v110 = vld [vmem:[#allocation5 + $0x70] sm:$0xff]
    %v111 = vld [vmem:[#allocation5 + $0x78] sm:$0xff]
    %112 = vmatprep.subr.mxu0 0.0
    %113 = vmatpush1.msra.mxu0 %v96
    %114 = vmatprep.subr.mxu0 0.0
    %115 = vmatpush1.msra.mxu0 %v97
    %116 = vmatprep.subr.mxu0 0.0
    %117 = vmatpush1.msra.mxu0 %v98
    %118 = vmatprep.subr.mxu0 0.0
    %119 = vmatpush1.msra.mxu0 %v99
    %120 = vmatprep.subr.mxu0 0.0
    %121 = vmatpush1.msra.mxu0 %v100
    %122 = vmatprep.subr.mxu0 0.0
    %123 = vmatpush1.msra.mxu0 %v101
    %124 = vmatprep.subr.mxu0 0.0
    %125 = vmatpush1.msra.mxu0 %v102
    %126 = vmatprep.subr.mxu0 0.0
    %127 = vmatpush1.msra.mxu0 %v103
    %128 = vmatprep.subr.mxu0 0.0
    %129 = vmatpush1.msra.mxu0 %v104
    %130 = vmatprep.subr.mxu0 0.0
    %131 = vmatpush1.msra.mxu0 %v105
    %132 = vmatprep.subr.mxu0 0.0
    %133 = vmatpush1.msra.mxu0 %v106
    %134 = vmatprep.subr.mxu0 0.0
    %135 = vmatpush1.msra.mxu0 %v107
    %136 = vmatprep.subr.mxu0 0.0
    %137 = vmatpush1.msra.mxu0 %v108
    %138 = vmatprep.subr.mxu0 0.0
    %139 = vmatpush1.msra.mxu0 %v109
    %140 = vmatprep.subr.mxu0 0.0
    %141 = vmatpush1.msra.mxu0 %v110
    %142 = vmatprep.subr.mxu0 0.0
    %143 = vmatpush1.msra.mxu0 %v111
    %144 = vmatprep.subr.mxu0 0.0
    %145 = vmatpush1.msra.mxu0 0.0
    %146 = vmatprep.subr.mxu0 0.0
    %147 = vmatpush1.msra.mxu0 0.0
    %148 = vmatprep.subr.mxu0 0.0
    %149 = vmatpush1.msra.mxu0 0.0
    %150 = vmatprep.subr.mxu0 0.0
    %151 = vmatpush1.msra.mxu0 0.0
    %152 = vmatprep.subr.mxu0 0.0
    %153 = vmatpush1.msra.mxu0 0.0
    %154 = vmatprep.subr.mxu0 0.0
    %155 = vmatpush1.msra.mxu0 0.0
    %156 = vmatprep.subr.mxu0 0.0
    %157 = vmatpush1.msra.mxu0 0.0
    %158 = vmatprep.subr.mxu0 0.0
    %159 = vmatpush1.msra.mxu0 0.0
    %160 = vmatprep.subr.mxu0 0.0
    %161 = vmatpush1.msra.mxu0 0.0
    %162 = vmatprep.subr.mxu0 0.0
    %163 = vmatpush1.msra.mxu0 0.0
    %164 = vmatprep.subr.mxu0 0.0
    %165 = vmatpush1.msra.mxu0 0.0
    %166 = vmatprep.subr.mxu0 0.0
    %167 = vmatpush1.msra.mxu0 0.0
    %168 = vmatprep.subr.mxu0 0.0
    %169 = vmatpush1.msra.mxu0 0.0
    %170 = vmatprep.subr.mxu0 0.0
    %171 = vmatpush1.msra.mxu0 0.0
    %172 = vmatprep.subr.mxu0 0.0
    %173 = vmatpush1.msra.mxu0 0.0
    %174 = vmatprep.subr.mxu0 0.0
    %175 = vmatpush1.msra.mxu0 0.0
    %176 = vmatprep.mubr.f32.mxu0 0.0
    %177 = vmatmul.mubr.f32.gmra.mrb[0].mxu0 %v88
    %v178 = vpop.f32.mrb[0].mxu0
    %v179 = vadd.f32 0.0, %v178
    %v180 = vpop.f32.mrb[0].mxu0
    %181 = vmatprep.mubr.f32.mxu0 0.0
    %182 = vmatmul.mubr.f32.gmra.mrb[0].mxu0 %v89
    %v183 = vpop.f32.mrb[0].mxu0
    %v184 = vadd.f32 0.0, %v183
    %v185 = vpop.f32.mrb[0].mxu0
    %186 = vmatprep.mubr.f32.mxu0 0.0
    %187 = vmatmul.mubr.f32.gmra.mrb[0].mxu0 %v90
    %v188 = vpop.f32.mrb[0].mxu0
    %v189 = vadd.f32 0.0, %v188
    %v190 = vpop.f32.mrb[0].mxu0
    %191 = vmatprep.mubr.f32.mxu0 0.0
    %192 = vmatmul.mubr.f32.gmra.mrb[0].mxu0 %v91
    %v193 = vpop.f32.mrb[0].mxu0
    %v194 = vadd.f32 0.0, %v193
    %v195 = vpop.f32.mrb[0].mxu0
    %196 = vmatprep.mubr.f32.mxu0 0.0
    %197 = vmatmul.mubr.f32.gmra.mrb[0].mxu0 %v92
    %v198 = vpop.f32.mrb[0].mxu0
    %v199 = vadd.f32 0.0, %v198
    %v200 = vpop.f32.mrb[0].mxu0
    %201 = vmatprep.mubr.f32.mxu0 0.0
    %202 = vmatmul.mubr.f32.gmra.mrb[0].mxu0 %v93
    %v203 = vpop.f32.mrb[0].mxu0
    %v204 = vadd.f32 0.0, %v203
    %v205 = vpop.f32.mrb[0].mxu0
    %206 = vmatprep.mubr.f32.mxu0 0.0
    %207 = vmatmul.mubr.f32.gmra.mrb[0].mxu0 %v94
    %v208 = vpop.f32.mrb[0].mxu0
    %v209 = vadd.f32 0.0, %v208
    %v210 = vpop.f32.mrb[0].mxu0
    %211 = vmatprep.mubr.f32.mxu0 0.0
    %212 = vmatmul.mubr.f32.gmra.mrb[0].mxu0 %v95
    %v213 = vpop.f32.mrb[0].mxu0
    %v214 = vadd.f32 0.0, %v213
    %v215 = vpop.f32.mrb[0].mxu0
    %216 = vdwg.mxu0
    %v217 = vadd.f32 %v179, %v184
    %v218 = vadd.f32 %v217, %v189
    %v219 = vadd.f32 %v218, %v194
    %v220 = vadd.f32 %v219, %v199
    %v221 = vadd.f32 %v220, %v204
    %v222 = vadd.f32 %v221, %v209
    %v223 = vadd.f32 %v222, %v214
    %v224 = vrot.slane %v223, 4
    %v225 = vadd.f32 %v223, %v224
    %v226 = vrot.slane %v225, 2
    %v227 = vadd.f32 %v225, %v226
    %v228 = vrot.slane %v227, 1
    %v229 = vadd.f32 %v227, %v228
    %v230 = vmul.f32 %v229, 0.015625
    %v231 = vmul.f32 %v179, %v179
    %v232 = vmul.f32 %v184, %v184
    %v233 = vmul.f32 %v189, %v189
    %v234 = vmul.f32 %v194, %v194
    %v235 = vmul.f32 %v199, %v199
    %v236 = vmul.f32 %v204, %v204
    %v237 = vmul.f32 %v209, %v209
    %v238 = vmul.f32 %v214, %v214
    %v239 = vadd.f32 %v231, %v232
    %v240 = vadd.f32 %v239, %v233
    %v241 = vadd.f32 %v240, %v234
    %v242 = vadd.f32 %v241, %v235
    %v243 = vadd.f32 %v242, %v236
    %v244 = vadd.f32 %v243, %v237
    %v245 = vadd.f32 %v244, %v238
    %v246 = vrot.slane %v245, 4
    %v247 = vadd.f32 %v245, %v246
    %v248 = vrot.slane %v247, 2
    %v249 = vadd.f32 %v247, %v248
    %v250 = vrot.slane %v249, 1
    %v251 = vadd.f32 %v249, %v250
    %v252 = vmul.f32 %v251, 0.015625
    %v253 = vmul.f32 %v230, %v230
    %v254 = vsub.f32 %v252, %v253
    %v255 = vmax.f32 %v254, 0.0
    %v256 = vld [vmem:[%s2] sm:$0x1]
    %v257 = vadd.f32 %v255, 1e-05
    %v258 = vrsqrt.pop %v257
    %v259 = vmul.f32 %v256, %v258
    %v260 = vld [vmem:[%s3] sm:$0x1]
    %v261 = vmul.f32 %v230, %v259
    %v262 = vsub.f32 %v260, %v261
    %v264 = vlaneseq
    %v265 = vshrl.u32 %v264, 7
    %v266 = vsub.s32 0, %v265
    %v267 = vrot.slane %v259, %v266
    %v269 = vmul.f32 %v179, %v267
    %v270 = vmul.f32 %v184, %v267
    %v271 = vmul.f32 %v189, %v267
    %v272 = vmul.f32 %v194, %v267
    %v273 = vmul.f32 %v199, %v267
    %v274 = vmul.f32 %v204, %v267
    %v275 = vmul.f32 %v209, %v267
    %v276 = vmul.f32 %v214, %v267
    %v278 = vlaneseq
    %v279 = vshrl.u32 %v278, 7
    %v280 = vsub.s32 0, %v279
    %v281 = vrot.slane %v262, %v280
    %v283 = vadd.f32 %v269, %v281
    %v284 = vadd.f32 %v270, %v281
    %v285 = vadd.f32 %v271, %v281
    %v286 = vadd.f32 %v272, %v281
    %v287 = vadd.f32 %v273, %v281
    %v288 = vadd.f32 %v274, %v281
    %v289 = vadd.f32 %v275, %v281
    %v290 = vadd.f32 %v276, %v281
    %vm291 = vcmp.gt.f32.partialorder %v283, 0.0
    %vm292 = vcmp.gt.f32.partialorder %v284, 0.0
    %vm293 = vcmp.gt.f32.partialorder %v285, 0.0
    %vm294 = vcmp.gt.f32.partialorder %v286, 0.0
    %vm295 = vcmp.gt.f32.partialorder %v287, 0.0
    %vm296 = vcmp.gt.f32.partialorder %v288, 0.0
    %vm297 = vcmp.gt.f32.partialorder %v289, 0.0
    %vm298 = vcmp.gt.f32.partialorder %v290, 0.0
    %v299 = vmul.f32 %v283, 0.01
    %v300 = vmul.f32 %v284, 0.01
    %v301 = vmul.f32 %v285, 0.01
    %v302 = vmul.f32 %v286, 0.01
    %v303 = vmul.f32 %v287, 0.01
    %v304 = vmul.f32 %v288, 0.01
    %v305 = vmul.f32 %v289, 0.01
    %v306 = vmul.f32 %v290, 0.01
    %v307 = vsel %vm291, %v283, %v299
    %v308 = vsel %vm292, %v284, %v300
    %v309 = vsel %vm293, %v285, %v301
    %v310 = vsel %vm294, %v286, %v302
    %v311 = vsel %vm295, %v287, %v303
    %v312 = vsel %vm296, %v288, %v304
    %v313 = vsel %vm297, %v289, %v305
    %v314 = vsel %vm298, %v290, %v306
    %v315 = vld [vmem:[#allocation7] sm:$0xff]
    %v316 = vld [vmem:[#allocation7 + $0x8] sm:$0xff]
    %v317 = vld [vmem:[#allocation7 + $0x10] sm:$0xff]
    %v318 = vld [vmem:[#allocation7 + $0x18] sm:$0xff]
    %v319 = vld [vmem:[#allocation7 + $0x20] sm:$0xff]
    %v320 = vld [vmem:[#allocation7 + $0x28] sm:$0xff]
    %v321 = vld [vmem:[#allocation7 + $0x30] sm:$0xff]
    %v322 = vld [vmem:[#allocation7 + $0x38] sm:$0xff]
    %v323 = vld [vmem:[#allocation7 + $0x40] sm:$0xff]
    %v324 = vld [vmem:[#allocation7 + $0x48] sm:$0xff]
    %v325 = vld [vmem:[#allocation7 + $0x50] sm:$0xff]
    %v326 = vld [vmem:[#allocation7 + $0x58] sm:$0xff]
    %v327 = vld [vmem:[#allocation7 + $0x60] sm:$0xff]
    %v328 = vld [vmem:[#allocation7 + $0x68] sm:$0xff]
    %v329 = vld [vmem:[#allocation7 + $0x70] sm:$0xff]
    %v330 = vld [vmem:[#allocation7 + $0x78] sm:$0xff]
    %331 = vmatprep.subr.mxu0 0.0
    %332 = vmatpush1.msra.mxu0 %v315
    %333 = vmatprep.subr.mxu0 0.0
    %334 = vmatpush1.msra.mxu0 %v316
    %335 = vmatprep.subr.mxu0 0.0
    %336 = vmatpush1.msra.mxu0 %v317
    %337 = vmatprep.subr.mxu0 0.0
    %338 = vmatpush1.msra.mxu0 %v318
    %339 = vmatprep.subr.mxu0 0.0
    %340 = vmatpush1.msra.mxu0 %v319
    %341 = vmatprep.subr.mxu0 0.0
    %342 = vmatpush1.msra.mxu0 %v320
    %343 = vmatprep.subr.mxu0 0.0
    %344 = vmatpush1.msra.mxu0 %v321
    %345 = vmatprep.subr.mxu0 0.0
    %346 = vmatpush1.msra.mxu0 %v322
    %347 = vmatprep.subr.mxu0 0.0
    %348 = vmatpush1.msra.mxu0 %v323
    %349 = vmatprep.subr.mxu0 0.0
    %350 = vmatpush1.msra.mxu0 %v324
    %351 = vmatprep.subr.mxu0 0.0
    %352 = vmatpush1.msra.mxu0 %v325
    %353 = vmatprep.subr.mxu0 0.0
    %354 = vmatpush1.msra.mxu0 %v326
    %355 = vmatprep.subr.mxu0 0.0
    %356 = vmatpush1.msra.mxu0 %v327
    %357 = vmatprep.subr.mxu0 0.0
    %358 = vmatpush1.msra.mxu0 %v328
    %359 = vmatprep.subr.mxu0 0.0
    %360 = vmatpush1.msra.mxu0 %v329
    %361 = vmatprep.subr.mxu0 0.0
    %362 = vmatpush1.msra.mxu0 %v330
    %363 = vmatprep.subr.mxu0 0.0
    %364 = vmatpush1.msra.mxu0 0.0
    %365 = vmatprep.subr.mxu0 0.0
    %366 = vmatpush1.msra.mxu0 0.0
    %367 = vmatprep.subr.mxu0 0.0
    %368 = vmatpush1.msra.mxu0 0.0
    %369 = vmatprep.subr.mxu0 0.0
    %370 = vmatpush1.msra.mxu0 0.0
    %371 = vmatprep.subr.mxu0 0.0
    %372 = vmatpush1.msra.mxu0 0.0
    %373 = vmatprep.subr.mxu0 0.0
    %374 = vmatpush1.msra.mxu0 0.0
    %375 = vmatprep.subr.mxu0 0.0
    %376 = vmatpush1.msra.mxu0 0.0
    %377 = vmatprep.subr.mxu0 0.0
    %378 = vmatpush1.msra.mxu0 0.0
    %379 = vmatprep.subr.mxu0 0.0
    %380 = vmatpush1.msra.mxu0 0.0
    %381 = vmatprep.subr.mxu0 0.0
    %382 = vmatpush1.msra.mxu0 0.0
    %383 = vmatprep.subr.mxu0 0.0
    %384 = vmatpush1.msra.mxu0 0.0
    %385 = vmatprep.subr.mxu0 0.0
    %386 = vmatpush1.msra.mxu0 0.0
    %387 = vmatprep.subr.mxu0 0.0
    %388 = vmatpush1.msra.mxu0 0.0
    %389 = vmatprep.subr.mxu0 0.0
    %390 = vmatpush1.msra.mxu0 0.0
    %391 = vmatprep.subr.mxu0 0.0
    %392 = vmatpush1.msra.mxu0 0.0
    %393 = vmatprep.subr.mxu0 0.0
    %394 = vmatpush1.msra.mxu0 0.0
    %395 = vmatprep.mubr.f32.mxu0 0.0
    %396 = vmatmul.mubr.f32.gmra.mrb[0].mxu0 %v307
    %v397 = vpop.f32.mrb[0].mxu0
    %v398 = vadd.f32 0.0, %v397
    %v399 = vpop.f32.mrb[0].mxu0
    %400 = vmatprep.mubr.f32.mxu0 0.0
    %401 = vmatmul.mubr.f32.gmra.mrb[0].mxu0 %v308
    %v402 = vpop.f32.mrb[0].mxu0
    %v403 = vadd.f32 0.0, %v402
    %v404 = vpop.f32.mrb[0].mxu0
    %405 = vmatprep.mubr.f32.mxu0 0.0
    %406 = vmatmul.mubr.f32.gmra.mrb[0].mxu0 %v309
    %v407 = vpop.f32.mrb[0].mxu0
    %v408 = vadd.f32 0.0, %v407
    %v409 = vpop.f32.mrb[0].mxu0
    %410 = vmatprep.mubr.f32.mxu0 0.0
    %411 = vmatmul.mubr.f32.gmra.mrb[0].mxu0 %v310
    %v412 = vpop.f32.mrb[0].mxu0
    %v413 = vadd.f32 0.0, %v412
    %v414 = vpop.f32.mrb[0].mxu0
    %415 = vmatprep.mubr.f32.mxu0 0.0
    %416 = vmatmul.mubr.f32.gmra.mrb[0].mxu0 %v311
    %v417 = vpop.f32.mrb[0].mxu0
    %v418 = vadd.f32 0.0, %v417
    %v419 = vpop.f32.mrb[0].mxu0
    %420 = vmatprep.mubr.f32.mxu0 0.0
    %421 = vmatmul.mubr.f32.gmra.mrb[0].mxu0 %v312
    %v422 = vpop.f32.mrb[0].mxu0
    %v423 = vadd.f32 0.0, %v422
    %v424 = vpop.f32.mrb[0].mxu0
    %425 = vmatprep.mubr.f32.mxu0 0.0
    %426 = vmatmul.mubr.f32.gmra.mrb[0].mxu0 %v313
    %v427 = vpop.f32.mrb[0].mxu0
    %v428 = vadd.f32 0.0, %v427
    %v429 = vpop.f32.mrb[0].mxu0
    %430 = vmatprep.mubr.f32.mxu0 0.0
    %431 = vmatmul.mubr.f32.gmra.mrb[0].mxu0 %v314
    %v432 = vpop.f32.mrb[0].mxu0
    %v433 = vadd.f32 0.0, %v432
    %v434 = vpop.f32.mrb[0].mxu0
    %435 = vdwg.mxu0
    %v436 = vadd.f32 %v398, %v403
    %v437 = vadd.f32 %v436, %v408
    %v438 = vadd.f32 %v437, %v413
    %v439 = vadd.f32 %v438, %v418
    %v440 = vadd.f32 %v439, %v423
    %v441 = vadd.f32 %v440, %v428
    %v442 = vadd.f32 %v441, %v433
    %v443 = vrot.slane %v442, 4
    %v444 = vadd.f32 %v442, %v443
    %v445 = vrot.slane %v444, 2
    %v446 = vadd.f32 %v444, %v445
    %v447 = vrot.slane %v446, 1
    %v448 = vadd.f32 %v446, %v447
    %v449 = vmul.f32 %v448, 0.015625
    %v450 = vmul.f32 %v398, %v398
    %v451 = vmul.f32 %v403, %v403
    %v452 = vmul.f32 %v408, %v408
    %v453 = vmul.f32 %v413, %v413
    %v454 = vmul.f32 %v418, %v418
    %v455 = vmul.f32 %v423, %v423
    %v456 = vmul.f32 %v428, %v428
    %v457 = vmul.f32 %v433, %v433
    %v458 = vadd.f32 %v450, %v451
    %v459 = vadd.f32 %v458, %v452
    %v460 = vadd.f32 %v459, %v453
    %v461 = vadd.f32 %v460, %v454
    %v462 = vadd.f32 %v461, %v455
    %v463 = vadd.f32 %v462, %v456
    %v464 = vadd.f32 %v463, %v457
    %v465 = vrot.slane %v464, 4
    %v466 = vadd.f32 %v464, %v465
    %v467 = vrot.slane %v466, 2
    %v468 = vadd.f32 %v466, %v467
    %v469 = vrot.slane %v468, 1
    %v470 = vadd.f32 %v468, %v469
    %v471 = vmul.f32 %v470, 0.015625
    %v472 = vmul.f32 %v449, %v449
    %v473 = vsub.f32 %v471, %v472
    %v474 = vmax.f32 %v473, 0.0
    %v475 = vld [vmem:[%s5] sm:$0x1]
    %v476 = vadd.f32 %v474, 1e-05
    %v477 = vrsqrt.pop %v476
    %v478 = vmul.f32 %v475, %v477
    %v479 = vld [vmem:[%s6] sm:$0x1]
    %v480 = vmul.f32 %v449, %v478
    %v481 = vsub.f32 %v479, %v480
    %v483 = vlaneseq
    %v484 = vshrl.u32 %v483, 7
    %v485 = vsub.s32 0, %v484
    %v486 = vrot.slane %v478, %v485
    %v488 = vmul.f32 %v398, %v486
    %v489 = vmul.f32 %v403, %v486
    %v490 = vmul.f32 %v408, %v486
    %v491 = vmul.f32 %v413, %v486
    %v492 = vmul.f32 %v418, %v486
    %v493 = vmul.f32 %v423, %v486
    %v494 = vmul.f32 %v428, %v486
    %v495 = vmul.f32 %v433, %v486
    %v497 = vlaneseq
    %v498 = vshrl.u32 %v497, 7
    %v499 = vsub.s32 0, %v498
    %v500 = vrot.slane %v481, %v499
    %v502 = vadd.f32 %v488, %v500
    %v503 = vadd.f32 %v489, %v500
    %v504 = vadd.f32 %v490, %v500
    %v505 = vadd.f32 %v491, %v500
    %v506 = vadd.f32 %v492, %v500
    %v507 = vadd.f32 %v493, %v500
    %v508 = vadd.f32 %v494, %v500
    %v509 = vadd.f32 %v495, %v500
    %vm510 = vcmp.gt.f32.partialorder %v502, 0.0
    %vm511 = vcmp.gt.f32.partialorder %v503, 0.0
    %vm512 = vcmp.gt.f32.partialorder %v504, 0.0
    %vm513 = vcmp.gt.f32.partialorder %v505, 0.0
    %vm514 = vcmp.gt.f32.partialorder %v506, 0.0
    %vm515 = vcmp.gt.f32.partialorder %v507, 0.0
    %vm516 = vcmp.gt.f32.partialorder %v508, 0.0
    %vm517 = vcmp.gt.f32.partialorder %v509, 0.0
    %v518 = vmul.f32 %v502, 0.01
    %v519 = vmul.f32 %v503, 0.01
    %v520 = vmul.f32 %v504, 0.01
    %v521 = vmul.f32 %v505, 0.01
    %v522 = vmul.f32 %v506, 0.01
    %v523 = vmul.f32 %v507, 0.01
    %v524 = vmul.f32 %v508, 0.01
    %v525 = vmul.f32 %v509, 0.01
    %v526 = vsel %vm510, %v502, %v518
    %v527 = vsel %vm511, %v503, %v519
    %v528 = vsel %vm512, %v504, %v520
    %v529 = vsel %vm513, %v505, %v521
    %v530 = vsel %vm514, %v506, %v522
    %v531 = vsel %vm515, %v507, %v523
    %v532 = vsel %vm516, %v508, %v524
    %v533 = vsel %vm517, %v509, %v525
    %v534 = vld [vmem:[#allocation8] sm:$0xff]
    %v535 = vld [vmem:[#allocation8 + $0x8] sm:$0xff]
    %v536 = vld [vmem:[#allocation8 + $0x10] sm:$0xff]
    %v537 = vld [vmem:[#allocation8 + $0x18] sm:$0xff]
    %v538 = vld [vmem:[#allocation8 + $0x20] sm:$0xff]
    %v539 = vld [vmem:[#allocation8 + $0x28] sm:$0xff]
    %v540 = vld [vmem:[#allocation8 + $0x30] sm:$0xff]
    %v541 = vld [vmem:[#allocation8 + $0x38] sm:$0xff]
    %v542 = vld [vmem:[#allocation8 + $0x40] sm:$0xff]
    %v543 = vld [vmem:[#allocation8 + $0x48] sm:$0xff]
    %v544 = vld [vmem:[#allocation8 + $0x50] sm:$0xff]
    %v545 = vld [vmem:[#allocation8 + $0x58] sm:$0xff]
    %v546 = vld [vmem:[#allocation8 + $0x60] sm:$0xff]
    %v547 = vld [vmem:[#allocation8 + $0x68] sm:$0xff]
    %v548 = vld [vmem:[#allocation8 + $0x70] sm:$0xff]
    %v549 = vld [vmem:[#allocation8 + $0x78] sm:$0xff]
    %v550 = vld [vmem:[%s8] sm:$0x1]
    %v552 = vlaneseq
    %v553 = vshrl.u32 %v552, 7
    %v554 = vsub.s32 0, %v553
    %v555 = vrot.slane %v550, %v554
    %557 = vmatprep.subr.mxu0 0.0
    %558 = vmatpush1.msra.mxu0 %v534
    %559 = vmatprep.subr.mxu0 0.0
    %560 = vmatpush1.msra.mxu0 %v535
    %561 = vmatprep.subr.mxu0 0.0
    %562 = vmatpush1.msra.mxu0 %v536
    %563 = vmatprep.subr.mxu0 0.0
    %564 = vmatpush1.msra.mxu0 %v537
    %565 = vmatprep.subr.mxu0 0.0
    %566 = vmatpush1.msra.mxu0 %v538
    %567 = vmatprep.subr.mxu0 0.0
    %568 = vmatpush1.msra.mxu0 %v539
    %569 = vmatprep.subr.mxu0 0.0
    %570 = vmatpush1.msra.mxu0 %v540
    %571 = vmatprep.subr.mxu0 0.0
    %572 = vmatpush1.msra.mxu0 %v541
    %573 = vmatprep.subr.mxu0 0.0
    %574 = vmatpush1.msra.mxu0 %v542
    %575 = vmatprep.subr.mxu0 0.0
    %576 = vmatpush1.msra.mxu0 %v543
    %577 = vmatprep.subr.mxu0 0.0
    %578 = vmatpush1.msra.mxu0 %v544
    %579 = vmatprep.subr.mxu0 0.0
    %580 = vmatpush1.msra.mxu0 %v545
    %581 = vmatprep.subr.mxu0 0.0
    %582 = vmatpush1.msra.mxu0 %v546
    %583 = vmatprep.subr.mxu0 0.0
    %584 = vmatpush1.msra.mxu0 %v547
    %585 = vmatprep.subr.mxu0 0.0
    %586 = vmatpush1.msra.mxu0 %v548
    %587 = vmatprep.subr.mxu0 0.0
    %588 = vmatpush1.msra.mxu0 %v549
    %589 = vmatprep.subr.mxu0 0.0
    %590 = vmatpush1.msra.mxu0 0.0
    %591 = vmatprep.subr.mxu0 0.0
    %592 = vmatpush1.msra.mxu0 0.0
    %593 = vmatprep.subr.mxu0 0.0
    %594 = vmatpush1.msra.mxu0 0.0
    %595 = vmatprep.subr.mxu0 0.0
    %596 = vmatpush1.msra.mxu0 0.0
    %597 = vmatprep.subr.mxu0 0.0
    %598 = vmatpush1.msra.mxu0 0.0
    %599 = vmatprep.subr.mxu0 0.0
    %600 = vmatpush1.msra.mxu0 0.0
    %601 = vmatprep.subr.mxu0 0.0
    %602 = vmatpush1.msra.mxu0 0.0
    %603 = vmatprep.subr.mxu0 0.0
    %604 = vmatpush1.msra.mxu0 0.0
    %605 = vmatprep.subr.mxu0 0.0
    %606 = vmatpush1.msra.mxu0 0.0
    %607 = vmatprep.subr.mxu0 0.0
    %608 = vmatpush1.msra.mxu0 0.0
    %609 = vmatprep.subr.mxu0 0.0
    %610 = vmatpush1.msra.mxu0 0.0
    %611 = vmatprep.subr.mxu0 0.0
    %612 = vmatpush1.msra.mxu0 0.0
    %613 = vmatprep.subr.mxu0 0.0
    %614 = vmatpush1.msra.mxu0 0.0
    %615 = vmatprep.subr.mxu0 0.0
    %616 = vmatpush1.msra.mxu0 0.0
    %617 = vmatprep.subr.mxu0 0.0
    %618 = vmatpush1.msra.mxu0 0.0
    %619 = vmatprep.subr.mxu0 0.0
    %620 = vmatpush1.msra.mxu0 0.0
    %621 = vmatprep.mubr.f32.mxu0 0.0
    %622 = vmatmul.mubr.f32.gmra.mrb[0].mxu0 %v526
    %v623 = vpop.f32.mrb[0].mxu0
    %v624 = vadd.f32 %v555, %v623
    %v625 = vpop.f32.mrb[0].mxu0
    %626 = vmatprep.mubr.f32.mxu0 0.0
    %627 = vmatmul.mubr.f32.gmra.mrb[0].mxu0 %v527
    %v628 = vpop.f32.mrb[0].mxu0
    %v629 = vadd.f32 %v555, %v628
    %v630 = vpop.f32.mrb[0].mxu0
    %631 = vmatprep.mubr.f32.mxu0 0.0
    %632 = vmatmul.mubr.f32.gmra.mrb[0].mxu0 %v528
    %v633 = vpop.f32.mrb[0].mxu0
    %v634 = vadd.f32 %v555, %v633
    %v635 = vpop.f32.mrb[0].mxu0
    %636 = vmatprep.mubr.f32.mxu0 0.0
    %637 = vmatmul.mubr.f32.gmra.mrb[0].mxu0 %v529
    %v638 = vpop.f32.mrb[0].mxu0
    %v639 = vadd.f32 %v555, %v638
    %v640 = vpop.f32.mrb[0].mxu0
    %641 = vmatprep.mubr.f32.mxu0 0.0
    %642 = vmatmul.mubr.f32.gmra.mrb[0].mxu0 %v530
    %v643 = vpop.f32.mrb[0].mxu0
    %v644 = vadd.f32 %v555, %v643
    %v645 = vpop.f32.mrb[0].mxu0
    %646 = vmatprep.mubr.f32.mxu0 0.0
    %647 = vmatmul.mubr.f32.gmra.mrb[0].mxu0 %v531
    %v648 = vpop.f32.mrb[0].mxu0
    %v649 = vadd.f32 %v555, %v648
    %v650 = vpop.f32.mrb[0].mxu0
    %651 = vmatprep.mubr.f32.mxu0 0.0
    %652 = vmatmul.mubr.f32.gmra.mrb[0].mxu0 %v532
    %v653 = vpop.f32.mrb[0].mxu0
    %v654 = vadd.f32 %v555, %v653
    %v655 = vpop.f32.mrb[0].mxu0
    %656 = vmatprep.mubr.f32.mxu0 0.0
    %657 = vmatmul.mubr.f32.gmra.mrb[0].mxu0 %v533
    %v658 = vpop.f32.mrb[0].mxu0
    %v659 = vadd.f32 %v555, %v658
    %v660 = vpop.f32.mrb[0].mxu0
    %661 = vdwg.mxu0
    %662 = vst [vmem:[#allocation10] sm:$0xff] %v624
    %663 = vst [vmem:[#allocation10 + $0x8] sm:$0xff] %v629
    %664 = vst [vmem:[#allocation10 + $0x10] sm:$0xff] %v634
    %665 = vst [vmem:[#allocation10 + $0x18] sm:$0xff] %v639
    %666 = vst [vmem:[#allocation10 + $0x20] sm:$0xff] %v644
    %667 = vst [vmem:[#allocation10 + $0x28] sm:$0xff] %v649
    %668 = vst [vmem:[#allocation10 + $0x30] sm:$0xff] %v654
    %669 = vst [vmem:[#allocation10 + $0x38] sm:$0xff] %v659
    // Predicated region
    $region54: #{tpu_custom_call.1} parent=1 // pred_check
      _
    $region55: #{tpu_custom_call.1} parent=1 // pred_check_branch
      %671 = sbr.rel (0) target = $region57
    $region56: #{tpu_custom_call.1} parent=1 // pred_region
      %s673 = ssub.s32 1024, 1024
      %674 = vsyncadd [#allocation4], %s673
      %s675 = sshll.u32 [#allocation10], 4
      %s676 = int_to_ptr.vmem [resolvable:$true] %s675
      %681 = dma.vmem_to_hbm [thread:$0]  %s676, 1024, %s9, [#allocation4], 128, 128, 8
    $region57: #{tpu_custom_call.1} parent=1 // pred_fallthru
      _
    // Predicated region
    $region58: #{tpu_custom_call.1} parent=1 // pred_check
      _
    $region59: #{tpu_custom_call.1} parent=1 // pred_check_branch
      %683 = sbr.rel (0) target = $region61
    $region60: #{tpu_custom_call.1} parent=1 // pred_region
      %684 = dma.done [#allocation4], 1024
    $region61: #{tpu_custom_call.1} parent=1 // pred_fallthru
      _
    %685 = vsyncpa [#allocation3], 1
    %686 = vsyncpa [#allocation6], 1
    %687 = vsyncpa [#allocation9], 1
    %688 = vsyncpa [#allocation4], 1

</llo_original>
